<compile_context>
chip_gen: v7x
topology: tpu7x:2x2x1
jax: 0.10.0
libtpu: 0.0.40
codegen_flags: <defaults>
</compile_context>

<pallas_src>
import jax
import jax.numpy as jnp
from jax.experimental import pallas as pl
from jax.experimental.pallas import tpu as pltpu

LANES = 128
MAX_COLS = 2048                          # wide, lane-dense slab (16 * 128)
TARGET_BLOCK_BYTES = 4 * 1024 * 1024     # per pipelined buffer; 4x = 16 MiB
VMEM_LIMIT_BYTES = 32 * 1024 * 1024      # explicit scoped limit, safe v5e/v6e/v7x
SMALL_UNALIGNED_BYTES = 1 << 20          # single-block path for awkward sizes


def _hard_swish_kernel(x_ref, o_ref):
    xf = x_ref[...].astype(jnp.float32)   # no-op for f32; accuracy for bf16/fp16
    hs = jnp.clip(xf + 3.0, 0.0, 6.0) * (1.0 / 6.0)
    o_ref[...] = (xf * hs).astype(o_ref.dtype)


def _round_up(a: int, b: int) -> int:
    return ((a + b - 1) // b) * b


def _cdiv(a: int, b: int) -> int:
    return -(-a // b)


def _widest_cols(n: int) -> int:
    """Largest multiple of 128 (<= MAX_COLS) that divides n."""
    for c in range(MAX_COLS, LANES - 1, -LANES):
        if n % c == 0:
            return c
    return LANES


def _launch_2d(x2d: jax.Array, sublanes: int) -> jax.Array:
    n_rows, n_cols = x2d.shape
    dtype = x2d.dtype
    itemsize = jnp.dtype(dtype).itemsize
    n = n_rows * n_cols
    cost = pl.CostEstimate(flops=5 * n, transcendentals=0,
                           bytes_accessed=2 * n * itemsize)

    # Row tile targeting ~TARGET_BLOCK_BYTES per buffer, sublane-aligned.
    row_tile = max(sublanes,
                   (TARGET_BLOCK_BYTES // (n_cols * itemsize))
                   // sublanes * sublanes)
    # Keep >= 2 blocks for medium tensors so both v7x TensorCores get work.
    if row_tile >= n_rows and n_rows > 2 * sublanes:
        row_tile = _round_up(_cdiv(n_rows, 2), sublanes)
    grid_size = _cdiv(n_rows, row_tile)

    if grid_size <= 1:
        # Tiny: whole array as one full-dims block (no alignment constraint).
        return pl.pallas_call(
            _hard_swish_kernel,
            out_shape=jax.ShapeDtypeStruct((n_rows, n_cols), dtype),
            compiler_params=pltpu.CompilerParams(
                vmem_limit_bytes=VMEM_LIMIT_BYTES),
            input_output_aliases={0: 0},
            cost_estimate=cost,
        )(x2d)

    # Gridded streaming path; last row-block may be ragged (Pallas masks the
    # partial writes, so no host-side pad is needed).
    return pl.pallas_call(
        _hard_swish_kernel,
        out_shape=jax.ShapeDtypeStruct((n_rows, n_cols), dtype),
        grid_spec=pltpu.PrefetchScalarGridSpec(
            num_scalar_prefetch=0,
            grid=(grid_size,),
            in_specs=[pl.BlockSpec((row_tile, n_cols), lambda i: (i, 0))],
            out_specs=pl.BlockSpec((row_tile, n_cols), lambda i: (i, 0)),
        ),
        compiler_params=pltpu.CompilerParams(
            dimension_semantics=("parallel",),
            vmem_limit_bytes=VMEM_LIMIT_BYTES),
        input_output_aliases={0: 0},
        cost_estimate=cost,
    )(x2d)


def hard_swish_pallas(x: jax.Array) -> jax.Array:
    """Applies hard-swish elementwise to a floating-point array of any shape."""
    if not jnp.issubdtype(x.dtype, jnp.floating):
        raise TypeError("hard_swish_pallas only supports floating dtypes, got "
                        f"{x.dtype}")
    orig_shape = x.shape
    n = x.size
    if n == 0:
        return x
    itemsize = jnp.dtype(x.dtype).itemsize
    # Sub-32-bit dtypes pack along sublanes: align row tiles accordingly.
    sublanes = {4: 8, 2: 16, 1: 32}.get(itemsize, 8)

    if n % LANES == 0:
        # Zero-copy fast path (the common NCHW feature-map case): free reshape
        # to a lane-dense slab, ragged last block handled by Pallas.
        n_cols = _widest_cols(n)
        out2d = _launch_2d(x.reshape(n // n_cols, n_cols), sublanes)
        return out2d.reshape(orig_shape)

    if n * itemsize <= SMALL_UNALIGNED_BYTES:
        # Small awkward size: one full-dims (1, n) block; no pad, no slice.
        out2d = _launch_2d(x.reshape(1, n), sublanes)
        return out2d.reshape(orig_shape)

    # Rare: large AND not a multiple of 128 lanes. Pad minimally to a lane
    # multiple (hard_swish(0) == 0) and slice the tail off afterwards.
    # TODO(synk): handle this tail in-kernel (scalar-prefetch length + iota
    # masked store) to remove the pad/slice HBM round trips entirely.
    padded = _round_up(n, LANES)
    x_flat = jnp.pad(x.reshape(-1), (0, padded - n))
    n_cols = _widest_cols(padded)
    out2d = _launch_2d(x_flat.reshape(padded // n_cols, n_cols), sublanes)
    return out2d.reshape(-1)[:n].reshape(orig_shape)


def _hard_swish_ref(x):
    xf = x.astype(jnp.float32)
    return (xf * jnp.clip(xf + 3.0, 0.0, 6.0) / 6.0).astype(x.dtype)


if __name__ == "__main__":
    key = jax.random.PRNGKey(0)

    # NCHW feature map (module's typical input), f32 -- zero-copy fast path.
    x = jax.random.normal(key, (2, 4, 16, 16), dtype=jnp.float32) * 4.0
    out = hard_swish_pallas(x)
    jax.block_until_ready(out)
    assert out.shape == x.shape and out.dtype == x.dtype
    assert jnp.allclose(out, _hard_swish_ref(x), atol=1e-5, rtol=1e-5)

    # Awkward size -- exercises the no-pad single-block path.
    x2 = jax.random.normal(jax.random.PRNGKey(1), (2, 3, 7, 5),
                           dtype=jnp.float32) * 4.0
    out2 = hard_swish_pallas(x2)
    jax.block_until_ready(out2)
    assert jnp.allclose(out2, _hard_swish_ref(x2), atol=1e-5, rtol=1e-5)

    # Low precision -- dtype-aware sublane alignment, f32 math in-kernel.
    x3 = (jax.random.normal(jax.random.PRNGKey(2), (2, 4, 16, 16),
                            dtype=jnp.float32) * 4.0).astype(jnp.bfloat16)
    out3 = hard_swish_pallas(x3)
    jax.block_until_ready(out3)
    assert out3.dtype == jnp.bfloat16
    assert jnp.allclose(out3.astype(jnp.float32),
                        _hard_swish_ref(x3).astype(jnp.float32),
                        atol=5e-2, rtol=5e-2)

    # Larger map -- exercises the multi-block grid with a ragged last block.
    x4 = jax.random.normal(jax.random.PRNGKey(3), (2, 32, 56, 56),
                           dtype=jnp.float32) * 4.0
    out4 = hard_swish_pallas(x4)
    jax.block_until_ready(out4)
    assert jnp.allclose(out4, _hard_swish_ref(x4), atol=1e-5, rtol=1e-5)

    print("KERNEL_OK")
</pallas_src>

<mosaic_0001>
module attributes {stable_mosaic.version = 11 : i64} {
  func.func @_hard_swish_kernel(%arg0: memref<1x2048xf32, #tpu.memory_space<vmem>>, %arg1: memref<1x2048xf32, #tpu.memory_space<vmem>>) attributes {dimension_semantics = [], scalar_prefetch = 0 : i64, scratch_operands = 0 : i64, tpu.core_type = #tpu.core_type<tc>} {
    %c0 = arith.constant 0 : index
    %c0_0 = arith.constant 0 : index
    %0 = vector.load %arg0[%c0, %c0_0] : memref<1x2048xf32, #tpu.memory_space<vmem>>, vector<1x2048xf32>
    %cst = arith.constant 3.000000e+00 : f32
    %1 = vector.broadcast %cst : f32 to vector<1x2048xf32>
    %2 = arith.addf %0, %1 : vector<1x2048xf32>
    %cst_1 = arith.constant 0.000000e+00 : f32
    %cst_2 = arith.constant 6.000000e+00 : f32
    %3 = vector.broadcast %cst_1 : f32 to vector<1x2048xf32>
    %4 = arith.maximumf %3, %2 : vector<1x2048xf32>
    %5 = vector.broadcast %cst_2 : f32 to vector<1x2048xf32>
    %6 = arith.minimumf %5, %4 : vector<1x2048xf32>
    %cst_3 = arith.constant 0.166666672 : f32
    %7 = vector.broadcast %cst_3 : f32 to vector<1x2048xf32>
    %8 = arith.mulf %6, %7 : vector<1x2048xf32>
    %9 = arith.mulf %0, %8 : vector<1x2048xf32>
    %c0_4 = arith.constant 0 : index
    %c0_5 = arith.constant 0 : index
    %10 = vector.load %arg1[%c0_4, %c0_5] : memref<1x2048xf32, #tpu.memory_space<vmem>>, vector<1x2048xf32>
    tpu.vector_store %arg1[%c0_4, %c0_5], %9 {strides = array<i32>} : memref<1x2048xf32, #tpu.memory_space<vmem>>, vector<1x2048xf32>,
    return
  }
}

</mosaic_0001>

<llo_original>
// kernel: tpu_custom_call.1
$region0: #{tpu_custom_call.1}
  #allocation0 [shape = 'u32[]', space=smem, size = 0x4, offset = 0x4, fixed_abs, tag = 'smem constant byte address 0x4 - core index']
  #allocation1 [shape = 'u32[144,128]{1,0:T(1,128)}', space=vmem, size = 0x12000, scoped, tag = 'internal scratch']
  %s0 = inlined_call_operand.hbm [shape: f32[1,2048], index: 0, kind: input, shape index: {}, may-alias: {0,1}]
  %s1 = inlined_call_operand.hbm [shape: f32[1,2048], index: 1, kind: output, shape index: {}, may-alias: {0,1}]
  %s2 = sld [smem:[#allocation0]]
  $region18: #{tpu_custom_call.1} parent=0
    _
  %s4 = ssub.s32 1, %s2
  %s5 = scalar_select 0, %s4, %s2
  $region1: #{tpu_custom_call.1} parent=0
    #allocation2 [shape = 'u8[8192]{0}', space=vmem, size = 0x2000, scoped, tag = 'input window, operand 0, single buffered']
    #allocation3 [shape = 's32[1]{0}', space=sflag, size = 0x4, scoped, tag = 'scoped memory for tpu_custom_call.1']
    #allocation4 [shape = 's32[1]{0}', space=sflag, size = 0x4, scoped, tag = 'scoped memory for tpu_custom_call.1']
    #allocation5 [shape = 'u8[8192]{0}', space=vmem, size = 0x2000, scoped, tag = 'output window, operand 0, single buffered']
    %6 = vsyncpa [#allocation3], 0
    %7 = vsyncpa [#allocation4], 0
    // Predicated region
    $region2: #{tpu_custom_call.1} parent=1 // pred_check
      _
    $region3: #{tpu_custom_call.1} parent=1 // pred_check_branch
      %9 = sbr.rel (0) target = $region5
    $region4: #{tpu_custom_call.1} parent=1 // pred_region
      %s11 = ssub.s32 256, 256
      %12 = vsyncadd [#allocation3], %s11
      %s14 = sshll.u32 [#allocation2], 4
      %s15 = int_to_ptr.vmem [resolvable:$true] %s14
      %17 = dma.hbm_to_vmem [thread:$0]  %s0, 256, %s15, [#allocation3]
    $region5: #{tpu_custom_call.1} parent=1 // pred_fallthru
      _
    // Predicated region
    $region6: #{tpu_custom_call.1} parent=1 // pred_check
      _
    $region7: #{tpu_custom_call.1} parent=1 // pred_check_branch
      %19 = sbr.rel (0) target = $region9
    $region8: #{tpu_custom_call.1} parent=1 // pred_region
      %20 = dma.done [#allocation3], 256
    $region9: #{tpu_custom_call.1} parent=1 // pred_fallthru
      _
    %v21 = vld [vmem:[#allocation2] sm:$0xff]
    %v22 = vld [vmem:[#allocation2 + $0x8] sm:$0xff]
    %v23 = vadd.f32 %v21, 3.0
    %v24 = vadd.f32 %v22, 3.0
    %v25 = vmax.f32 %v23, 0.0
    %v26 = vmax.f32 %v24, 0.0
    %v27 = vmin.f32 %v25, 6.0
    %v28 = vmin.f32 %v26, 6.0
    %v29 = vmul.f32 %v27, 0.16666667
    %v30 = vmul.f32 %v28, 0.16666667
    %v31 = vmul.f32 %v21, %v29
    %v32 = vmul.f32 %v22, %v30
    %33 = vst [vmem:[#allocation5] sm:$0xff] %v31
    %34 = vst [vmem:[#allocation5 + $0x8] sm:$0xff] %v32
    // Predicated region
    $region10: #{tpu_custom_call.1} parent=1 // pred_check
      _
    $region11: #{tpu_custom_call.1} parent=1 // pred_check_branch
      %36 = sbr.rel (0) target = $region13
    $region12: #{tpu_custom_call.1} parent=1 // pred_region
      %s38 = ssub.s32 256, 256
      %39 = vsyncadd [#allocation4], %s38
      %s41 = sshll.u32 [#allocation5], 4
      %s42 = int_to_ptr.vmem [resolvable:$true] %s41
      %44 = dma.vmem_to_hbm [thread:$0]  %s42, 256, %s1, [#allocation4]
    $region13: #{tpu_custom_call.1} parent=1 // pred_fallthru
      _
    // Predicated region
    $region14: #{tpu_custom_call.1} parent=1 // pred_check
      _
    $region15: #{tpu_custom_call.1} parent=1 // pred_check_branch
      %46 = sbr.rel (0) target = $region17
    $region16: #{tpu_custom_call.1} parent=1 // pred_region
      %47 = dma.done [#allocation4], 256
    $region17: #{tpu_custom_call.1} parent=1 // pred_fallthru
      _
    %48 = vsyncpa [#allocation3], 1
    %49 = vsyncpa [#allocation4], 1

</llo_original>
